<compile_context>
chip_gen: v5e
topology: v5e:2x2
jax: 0.10.0
libtpu: 0.0.40
codegen_flags: <defaults>
</compile_context>

<pallas_src>
import functools

import jax
import jax.numpy as jnp
from jax import lax
from jax.experimental import pallas as pl
from jax.experimental.pallas import tpu as pltpu

LANE = 128
SUBLANE = 8


def _max_tile_rows():
    """Per-step block height, chosen from the chip's VMEM size.

    128 MiB parts (v5e/v6e) get 8 MiB input blocks (16384 rows); 64 MiB parts
    (v7x) keep 4 MiB blocks (8192 rows) for headroom.
    """
    try:
        vmem_bytes = int(pltpu.get_tpu_info().vmem_capacity_bytes)
    except Exception:
        vmem_bytes = 64 * 1024 * 1024
    return 16384 if vmem_bytes >= (100 << 20) else 8192


def _default_num_splits():
    # Dual-TensorCore parts (v7x) can run two independent partial reductions
    # (leading "parallel" grid axis).  Best-effort detection; falls back to 1
    # (single-TC v5e/v6e behaviour, also correct when run sequentially).
    try:
        return max(1, min(2, int(getattr(jax.devices()[0], "num_cores", 1))))
    except Exception:
        return 1


def _gnll_kernel(mean_ref, std_ref, true_ref, out_ref, acc_ref, *,
                 n_elems, tile_rows, steps_per_split, need_mask,
                 var_reg_weight):
    c = pl.program_id(0)   # split (TensorCore) index
    i = pl.program_id(1)   # step within this split

    mu = mean_ref[...].astype(jnp.float32)
    std = std_ref[...].astype(jnp.float32)
    yt = true_ref[...].astype(jnp.float32)

    var = std * std
    diff = yt - mu
    # 0.5*log(var) == log(|std|): saves a multiply and a dependency.
    loss = jnp.log(jnp.abs(std)) + 0.5 * diff * diff * pl.reciprocal(var, approx=False)
    # Fuse the regularizer into a single reduction:
    #   mean(loss) + w*mean(var) == sum(loss + w*var) / n
    fused = loss + jnp.float32(var_reg_weight) * var

    if need_mask:
        # Row-bound compare (no flat element index) -> no int32 overflow even
        # for very large N; only the tail of the last partial row is masked.
        full_rows = n_elems // LANE
        rem = n_elems % LANE
        grow = ((c * steps_per_split + i) * tile_rows
                + lax.broadcasted_iota(jnp.int32, (tile_rows, LANE), 0))
        lane = lax.broadcasted_iota(jnp.int32, (tile_rows, LANE), 1)
        valid = (grow < full_rows) | ((grow == full_rows) & (lane < rem))
        fused = jnp.where(valid, fused, 0.0)

    # Standard init-then-unconditionally-accumulate pattern so the elementwise
    # chain fuses with the add (no full-tile `fused` temp pinned across ifs).
    @pl.when(i == 0)
    def _init():
        acc_ref[...] = jnp.zeros_like(acc_ref)

    # Single-vreg accumulator: fold the tile's (tile_rows/8) sublane chunks.
    # Same VALU add count as a full-tile accumulator, but no 4-8 MiB of
    # accumulator load/store traffic per step and a trivial epilogue reduce.
    acc_ref[...] += fused.reshape(tile_rows // SUBLANE, SUBLANE, LANE).sum(axis=0)

    @pl.when(i == steps_per_split - 1)
    def _finalize():
        out_ref[0, 0] = jnp.sum(acc_ref[...])


def gaussian_nll_loss(y_pred_mean, y_pred_std, y_true, var_reg_weight=0.01,
                      num_splits=None):
    assert y_pred_mean.shape == y_pred_std.shape == y_true.shape
    n_elems = int(y_pred_mean.size)

    # Rows of a lane-dense (rows, 128) slab, rounded to a sublane multiple so
    # the single-vreg accumulator reshape (tile_rows % 8 == 0) always holds.
    n_rows = -(-n_elems // LANE)
    n_rows = -(-n_rows // SUBLANE) * SUBLANE

    max_tile_rows = _max_tile_rows()
    if n_rows <= max_tile_rows:
        tile_rows = n_rows          # single step; block == full array dims
        num_steps = 1
    else:
        tile_rows = max_tile_rows   # multiple of 8
        num_steps = -(-n_rows // tile_rows)

    if num_splits is None:
        num_splits = _default_num_splits()
    if num_steps < num_splits or num_steps % num_splits != 0:
        num_splits = 1
    steps_per_split = num_steps // num_splits

    grid_rows = num_steps * tile_rows
    n_padded = grid_rows * LANE
    need_mask = n_padded != n_elems

    def as_slab(x, pad_value):
        x = jnp.ravel(x)   # free reshape for contiguous inputs; no dtype cast
        if need_mask:
            # Only hit for unaligned sizes (not the test shape).  The in-kernel
            # mask makes the result exact regardless of pad values.
            # TODO(synk): for very large unaligned N, handle the ragged last
            # block in-kernel (pl.ANY + manual DMA) to avoid this XLA copy.
            x = jnp.pad(x, (0, n_padded - n_elems), constant_values=pad_value)
        return x.reshape(grid_rows, LANE)

    mean2d = as_slab(y_pred_mean, 0.0)
    std2d = as_slab(y_pred_std, 1.0)   # benign pad value for log/reciprocal
    true2d = as_slab(y_true, 0.0)

    kernel = functools.partial(
        _gnll_kernel,
        n_elems=n_elems,
        tile_rows=tile_rows,
        steps_per_split=steps_per_split,
        need_mask=need_mask,
        var_reg_weight=float(var_reg_weight),
    )

    tile_spec = pl.BlockSpec(
        (tile_rows, LANE), lambda c, i: (c * steps_per_split + i, 0))

    # Right-size the scoped-VMEM request: 3 inputs x 2 pipeline buffers at the
    # actual input dtypes, plus allowance for elementwise f32 temps and slack.
    in_block_bytes = tile_rows * LANE * sum(
        a.dtype.itemsize for a in (mean2d, std2d, true2d))
    temp_bytes = 4 * tile_rows * LANE * 4
    vmem_limit = max(32 << 20, min(2 * in_block_bytes + temp_bytes + (4 << 20),
                                   100 << 20))

    partials = pl.pallas_call(
        kernel,
        out_shape=jax.ShapeDtypeStruct((num_splits, 1), jnp.float32),
        grid_spec=pltpu.PrefetchScalarGridSpec(
            num_scalar_prefetch=0,
            grid=(num_splits, steps_per_split),
            in_specs=[tile_spec, tile_spec, tile_spec],
            out_specs=pl.BlockSpec(
                (1, 1), lambda c, i: (c, 0),
                memory_space=pltpu.MemorySpace.SMEM),
            scratch_shapes=[pltpu.VMEM((SUBLANE, LANE), jnp.float32)],
        ),
        compiler_params=pltpu.CompilerParams(
            dimension_semantics=("parallel", "arbitrary"),
            vmem_limit_bytes=vmem_limit,
        ),
    )(mean2d, std2d, true2d)

    return jnp.sum(partials) * jnp.float32(1.0 / n_elems)


def _reference(y_pred_mean, y_pred_std, y_true, var_reg_weight=0.01):
    var = y_pred_std ** 2
    loss = 0.5 * jnp.log(var) + 0.5 * (y_true - y_pred_mean) ** 2 / var
    var_reg = var_reg_weight * jnp.mean(var)
    return jnp.mean(loss) + var_reg


if __name__ == "__main__":
    key = jax.random.PRNGKey(0)
    k1, k2, k3 = jax.random.split(key, 3)
    shape = (2, 4, 16, 16)  # NCHW
    y_pred_mean = jax.random.normal(k1, shape, dtype=jnp.float32)
    # strictly positive std so log(var) is finite (matches typical usage)
    y_pred_std = jax.nn.softplus(jax.random.normal(k2, shape, dtype=jnp.float32)) + 0.1
    y_true = jax.random.normal(k3, shape, dtype=jnp.float32)

    out = gaussian_nll_loss(y_pred_mean, y_pred_std, y_true)
    out = jax.block_until_ready(out)

    ref = _reference(y_pred_mean, y_pred_std, y_true)
    assert jnp.allclose(out, ref, rtol=1e-5, atol=1e-5), (out, ref)
    print("KERNEL_OK")
</pallas_src>

<mosaic_0001>
module attributes {stable_mosaic.version = 11 : i64} {
  func.func @_gnll_kernel(%arg0: i32, %arg1: i32, %arg2: memref<16x128xf32, #tpu.memory_space<vmem>>, %arg3: memref<16x128xf32, #tpu.memory_space<vmem>>, %arg4: memref<16x128xf32, #tpu.memory_space<vmem>>, %arg5: memref<1x1xf32, #tpu.memory_space<smem>>, %arg6: memref<8x128xf32, #tpu.memory_space<vmem>>) attributes {dimension_semantics = [#tpu.dimension_semantics<parallel>, #tpu.dimension_semantics<arbitrary>], iteration_bounds = array<i64: 1, 1>, scalar_prefetch = 0 : i64, scratch_operands = 1 : i64, tpu.core_type = #tpu.core_type<tc>, window_params = [{transform_indices = @transform_0, window_bounds = array<i64: 16, 128>}, {transform_indices = @transform_1, window_bounds = array<i64: 16, 128>}, {transform_indices = @transform_2, window_bounds = array<i64: 16, 128>}, {transform_indices = @transform_3, window_bounds = array<i64: 1, 1>}]} {
    %c0 = arith.constant 0 : index
    %c0_0 = arith.constant 0 : index
    %0 = vector.load %arg2[%c0, %c0_0] : memref<16x128xf32, #tpu.memory_space<vmem>>, vector<16x128xf32>
    %c0_1 = arith.constant 0 : index
    %c0_2 = arith.constant 0 : index
    %1 = vector.load %arg3[%c0_1, %c0_2] : memref<16x128xf32, #tpu.memory_space<vmem>>, vector<16x128xf32>
    %c0_3 = arith.constant 0 : index
    %c0_4 = arith.constant 0 : index
    %2 = vector.load %arg4[%c0_3, %c0_4] : memref<16x128xf32, #tpu.memory_space<vmem>>, vector<16x128xf32>
    %3 = arith.mulf %1, %1 : vector<16x128xf32>
    %4 = arith.subf %2, %0 : vector<16x128xf32>
    %5 = math.absf %1 : vector<16x128xf32>
    %6 = math.log %5 : vector<16x128xf32>
    %cst = arith.constant 5.000000e-01 : f32
    %7 = vector.broadcast %cst : f32 to vector<16x128xf32>
    %8 = arith.mulf %7, %4 : vector<16x128xf32>
    %9 = arith.mulf %8, %4 : vector<16x128xf32>
    %10 = tpu.reciprocal %3 : vector<16x128xf32> -> vector<16x128xf32>
    %11 = arith.mulf %9, %10 : vector<16x128xf32>
    %12 = arith.addf %6, %11 : vector<16x128xf32>
    %cst_5 = arith.constant 0.00999999977 : f32
    %13 = vector.broadcast %cst_5 : f32 to vector<16x128xf32>
    %14 = arith.mulf %13, %3 : vector<16x128xf32>
    %15 = arith.addf %12, %14 : vector<16x128xf32>
    %c0_i32 = arith.constant 0 : i32
    %16 = arith.cmpi eq, %arg1, %c0_i32 : i32
    %17 = arith.extui %16 : i1 to i32
    %c0_i32_6 = arith.constant 0 : i32
    %18 = arith.cmpi ne, %17, %c0_i32_6 : i32
    scf.if %18 {
      %cst_14 = arith.constant 0.000000e+00 : f32
      %27 = vector.broadcast %cst_14 : f32 to vector<8x128xf32>
      %c0_15 = arith.constant 0 : index
      %c0_16 = arith.constant 0 : index
      %28 = vector.load %arg6[%c0_15, %c0_16] : memref<8x128xf32, #tpu.memory_space<vmem>>, vector<8x128xf32>
      tpu.vector_store %arg6[%c0_15, %c0_16], %27 {strides = array<i32>} : memref<8x128xf32, #tpu.memory_space<vmem>>, vector<8x128xf32>,
    } else {
    }
    %c0_7 = arith.constant 0 : index
    %c0_8 = arith.constant 0 : index
    %19 = vector.load %arg6[%c0_7, %c0_8] : memref<8x128xf32, #tpu.memory_space<vmem>>, vector<8x128xf32>
    %20 = vector.shape_cast %15 : vector<16x128xf32> to vector<2x8x128xf32>
    %cst_9 = arith.constant dense<0.000000e+00> : vector<8x128xf32>
    %21 = vector.multi_reduction <add>, %20, %cst_9 [0] : vector<2x8x128xf32> to vector<8x128xf32>
    %22 = arith.addf %19, %21 : vector<8x128xf32>
    %c0_10 = arith.constant 0 : index
    %c0_11 = arith.constant 0 : index
    %23 = vector.load %arg6[%c0_10, %c0_11] : memref<8x128xf32, #tpu.memory_space<vmem>>, vector<8x128xf32>
    tpu.vector_store %arg6[%c0_10, %c0_11], %22 {strides = array<i32>} : memref<8x128xf32, #tpu.memory_space<vmem>>, vector<8x128xf32>,
    %c0_i32_12 = arith.constant 0 : i32
    %24 = arith.cmpi eq, %arg1, %c0_i32_12 : i32
    %25 = arith.extui %24 : i1 to i32
    %c0_i32_13 = arith.constant 0 : i32
    %26 = arith.cmpi ne, %25, %c0_i32_13 : i32
    scf.if %26 {
      %c0_14 = arith.constant 0 : index
      %c0_15 = arith.constant 0 : index
      %27 = vector.load %arg6[%c0_14, %c0_15] : memref<8x128xf32, #tpu.memory_space<vmem>>, vector<8x128xf32>
      %28 = vector.shape_cast %27 : vector<8x128xf32> to vector<1x8x128xf32>
      %cst_16 = arith.constant dense<0.000000e+00> : vector<1xf32>
      %29 = vector.multi_reduction <add>, %28, %cst_16 [1, 2] : vector<1x8x128xf32> to vector<1xf32>
      %30 = vector.shape_cast %29 : vector<1xf32> to vector<1x1x1xf32>
      %31 = vector.extract %30[0, 0, 0] : f32 from vector<1x1x1xf32>
      %c0_17 = arith.constant 0 : index
      %c0_18 = arith.constant 0 : index
      %32 = memref.load %arg5[%c0_17, %c0_18] : memref<1x1xf32, #tpu.memory_space<smem>>
      memref.store %31, %arg5[%c0_17, %c0_18] : memref<1x1xf32, #tpu.memory_space<smem>>
    } else {
    }
    return
  }
  func.func @transform_0(%arg0: i32, %arg1: i32) -> (i32, i32) {
    %c1_i32 = arith.constant 1 : i32
    %0 = arith.muli %arg0, %c1_i32 : i32
    %1 = arith.addi %0, %arg1 : i32
    %c0_i32 = arith.constant 0 : i32
    %c0_i32_0 = arith.constant 0 : i32
    return %1, %c0_i32 : i32, i32
  }
  func.func @transform_1(%arg0: i32, %arg1: i32) -> (i32, i32) {
    %c1_i32 = arith.constant 1 : i32
    %0 = arith.muli %arg0, %c1_i32 : i32
    %1 = arith.addi %0, %arg1 : i32
    %c0_i32 = arith.constant 0 : i32
    %c0_i32_0 = arith.constant 0 : i32
    return %1, %c0_i32 : i32, i32
  }
  func.func @transform_2(%arg0: i32, %arg1: i32) -> (i32, i32) {
    %c1_i32 = arith.constant 1 : i32
    %0 = arith.muli %arg0, %c1_i32 : i32
    %1 = arith.addi %0, %arg1 : i32
    %c0_i32 = arith.constant 0 : i32
    %c0_i32_0 = arith.constant 0 : i32
    return %1, %c0_i32 : i32, i32
  }
  func.func @transform_3(%arg0: i32, %arg1: i32) -> (i32, i32) {
    %c0_i32 = arith.constant 0 : i32
    %c0_i32_0 = arith.constant 0 : i32
    return %arg0, %c0_i32 : i32, i32
  }
}

</mosaic_0001>

<llo_original>
// kernel: tpu_custom_call.1
$region0: #{tpu_custom_call.1}
  #allocation0 [shape = 'u32[]', space=smem, size = 0x4, offset = 0x4, fixed_abs, tag = 'smem constant byte address 0x4 - core index']
  #allocation1 [shape = 'u32[72,128]{1,0:T(1,128)}', space=vmem, size = 0x9000, scoped, tag = 'internal scratch']
  #allocation2 [shape = 'f32[8,128]{1,0:T(8,128)}', space=vmem, size = 0x1000, scoped, tag = 'scratch operand']
  %s0 = inlined_call_operand.hbm [shape: f32[16,128], index: 0, kind: input, shape index: {}]
  %s1 = inlined_call_operand.hbm [shape: f32[16,128], index: 1, kind: input, shape index: {}]
  %s2 = inlined_call_operand.hbm [shape: f32[16,128], index: 2, kind: input, shape index: {}]
  %s3 = inlined_call_operand.hbm [shape: f32[1,1], index: 3, kind: output, shape index: {}]
  %s4 = sld [smem:[#allocation0]]
  $region42: #{tpu_custom_call.1} parent=0
    _
  %s6 = ssub.s32 1, %s4
  %s7 = scalar_select 0, %s6, %s4
  $region1: #{tpu_custom_call.1} parent=0
    #allocation3 [shape = 'u8[8192]{0}', space=vmem, size = 0x2000, scoped, tag = 'input window, operand 0, single buffered']
    #allocation4 [shape = 's32[1]{0}', space=sflag, size = 0x4, scoped, tag = 'scoped memory for tpu_custom_call.1']
    #allocation5 [shape = 's32[1]{0}', space=sflag, size = 0x4, scoped, tag = 'scoped memory for tpu_custom_call.1']
    #allocation6 [shape = 'u8[8192]{0}', space=vmem, size = 0x2000, scoped, tag = 'input window, operand 1, single buffered']
    #allocation7 [shape = 's32[1]{0}', space=sflag, size = 0x4, scoped, tag = 'scoped memory for tpu_custom_call.1']
    #allocation8 [shape = 'u8[8192]{0}', space=vmem, size = 0x2000, scoped, tag = 'input window, operand 2, single buffered']
    #allocation9 [shape = 'u8[512]{0}', space=smem, size = 0x200, scoped, tag = 'output window, operand 0, single buffered']
    %8 = vsyncpa [#allocation4], 0
    %9 = vsyncpa [#allocation7], 0
    %10 = vsyncpa [#allocation5], 0
    // Predicated region
    $region2: #{tpu_custom_call.1} parent=1 // pred_check
      _
    $region3: #{tpu_custom_call.1} parent=1 // pred_check_branch
      %12 = sbr.rel (0) target = $region5
    $region4: #{tpu_custom_call.1} parent=1 // pred_region
      %s13 = sadd.s32 0, 0
      %s14 = smul.u32 2, %s13
      %16 = vsyncadd [#allocation4], 0
      %s17 = smul.addr %s14, 8
      %s18 = scalar_lea.hbm %s0, %s17
      %s19 = sshll.u32 %s18, 4
      %s20 = int_to_ptr.hbm [resolvable:$true] %s19
      %s21 = sshll.u32 [#allocation3], 4
      %s22 = int_to_ptr.vmem [resolvable:$true] %s21
      %27 = dma.hbm_to_vmem [thread:$0]  %s20, 256, %s22, [#allocation4], 128, 128, 8
    $region5: #{tpu_custom_call.1} parent=1 // pred_fallthru
      _
    // Predicated region
    $region6: #{tpu_custom_call.1} parent=1 // pred_check
      _
    $region7: #{tpu_custom_call.1} parent=1 // pred_check_branch
      %29 = sbr.rel (0) target = $region9
    $region8: #{tpu_custom_call.1} parent=1 // pred_region
      %s30 = sadd.s32 0, 0
      %s31 = smul.u32 2, %s30
      %33 = vsyncadd [#allocation7], 0
      %s34 = smul.addr %s31, 8
      %s35 = scalar_lea.hbm %s1, %s34
      %s36 = sshll.u32 %s35, 4
      %s37 = int_to_ptr.hbm [resolvable:$true] %s36
      %s38 = sshll.u32 [#allocation6], 4
      %s39 = int_to_ptr.vmem [resolvable:$true] %s38
      %44 = dma.hbm_to_vmem [thread:$0]  %s37, 256, %s39, [#allocation7], 128, 128, 8
    $region9: #{tpu_custom_call.1} parent=1 // pred_fallthru
      _
    // Predicated region
    $region10: #{tpu_custom_call.1} parent=1 // pred_check
      _
    $region11: #{tpu_custom_call.1} parent=1 // pred_check_branch
      %46 = sbr.rel (0) target = $region13
    $region12: #{tpu_custom_call.1} parent=1 // pred_region
      %s47 = sadd.s32 0, 0
      %s48 = smul.u32 2, %s47
      %50 = vsyncadd [#allocation7], 0
      %s51 = smul.addr %s48, 8
      %s52 = scalar_lea.hbm %s2, %s51
      %s53 = sshll.u32 %s52, 4
      %s54 = int_to_ptr.hbm [resolvable:$true] %s53
      %s55 = sshll.u32 [#allocation8], 4
      %s56 = int_to_ptr.vmem [resolvable:$true] %s55
      %61 = dma.hbm_to_vmem [thread:$0]  %s54, 256, %s56, [#allocation7], 128, 128, 8
    $region13: #{tpu_custom_call.1} parent=1 // pred_fallthru
      _
    // Predicated region
    $region14: #{tpu_custom_call.1} parent=1 // pred_check
      _
    $region15: #{tpu_custom_call.1} parent=1 // pred_check_branch
      %63 = sbr.rel (0) target = $region17
    $region16: #{tpu_custom_call.1} parent=1 // pred_region
      %65 = dma.done [#allocation4], 256
    $region17: #{tpu_custom_call.1} parent=1 // pred_fallthru
      _
    // Predicated region
    $region18: #{tpu_custom_call.1} parent=1 // pred_check
      _
    $region19: #{tpu_custom_call.1} parent=1 // pred_check_branch
      %67 = sbr.rel (0) target = $region21
    $region20: #{tpu_custom_call.1} parent=1 // pred_region
      %69 = dma.done [#allocation7], 256
    $region21: #{tpu_custom_call.1} parent=1 // pred_fallthru
      _
    // Predicated region
    $region22: #{tpu_custom_call.1} parent=1 // pred_check
      _
    $region23: #{tpu_custom_call.1} parent=1 // pred_check_branch
      %71 = sbr.rel (0) target = $region25
    $region24: #{tpu_custom_call.1} parent=1 // pred_region
      %73 = dma.done [#allocation7], 256
    $region25: #{tpu_custom_call.1} parent=1 // pred_fallthru
      _
    %s74 = sadd.s32 0, 0
    %s75 = smul.u32 2, %s74
    %s76 = sadd.s32 0, 0
    %s77 = smul.u32 2, %s76
    %s78 = sadd.s32 0, 0
    %s79 = smul.u32 2, %s78
    %v80 = vld [vmem:[#allocation3] sm:$0xff]
    %v81 = vld [vmem:[#allocation3 + $0x8] sm:$0xff]
    %v82 = vld [vmem:[#allocation6] sm:$0xff]
    %v83 = vld [vmem:[#allocation6 + $0x8] sm:$0xff]
    %v84 = vld [vmem:[#allocation8] sm:$0xff]
    %v85 = vld [vmem:[#allocation8 + $0x8] sm:$0xff]
    %v86 = vmul.f32 %v82, %v82
    %v87 = vmul.f32 %v83, %v83
    %v88 = vsub.f32 %v84, %v80
    %v89 = vsub.f32 %v85, %v81
    %v90 = vand.u32 2147483647, %v82
    %v91 = vand.u32 2147483647, %v83
    %v92 = vlog2.pop %v90
    %v93 = vmul.f32 %v92, 0.6931472
    %v94 = vlog2.pop %v91
    %v95 = vmul.f32 %v94, 0.6931472
    %v96 = vmul.f32 %v88, 0.5
    %v97 = vmul.f32 %v89, 0.5
    %v98 = vmul.f32 %v96, %v88
    %v99 = vmul.f32 %v97, %v89
    %v100 = vrcp.pop %v86
    %v101 = vmul.f32 %v86, %v100
    %v102 = vsub.f32 1.0, %v101
    %v103 = vmul.f32 %v100, %v102
    %v104 = vadd.f32 %v100, %v103
    %vm105 = vweird.f32 %v86
    %vm106 = vweird.f32 %v100
    %vm107 = vmor %vm105, %vm106
    %v108 = vsel %vm107, %v100, %v104
    %v109 = vand.u32 2147483647, %v86
    %vm110 = vcmp.eq.f32.partialorder %v109, 8.507059e+37
    %v111 = vand.u32 %v86, 2147483648
    %v112 = vor.u32 1.1754944e-38, %v111
    %v113 = vsel %vm110, %v112, %v108
    %v114 = vrcp.pop %v87
    %v115 = vmul.f32 %v87, %v114
    %v116 = vsub.f32 1.0, %v115
    %v117 = vmul.f32 %v114, %v116
    %v118 = vadd.f32 %v114, %v117
    %vm119 = vweird.f32 %v87
    %vm120 = vweird.f32 %v114
    %vm121 = vmor %vm119, %vm120
    %v122 = vsel %vm121, %v114, %v118
    %v123 = vand.u32 2147483647, %v87
    %vm124 = vcmp.eq.f32.partialorder %v123, 8.507059e+37
    %v125 = vand.u32 %v87, 2147483648
    %v126 = vor.u32 1.1754944e-38, %v125
    %v127 = vsel %vm124, %v126, %v122
    %v128 = vmul.f32 %v98, %v113
    %v129 = vmul.f32 %v99, %v127
    %v130 = vadd.f32 %v93, %v128
    %v131 = vadd.f32 %v95, %v129
    %v132 = vmul.f32 %v86, 0.01
    %v133 = vmul.f32 %v87, 0.01
    %v134 = vadd.f32 %v130, %v132
    %v135 = vadd.f32 %v131, %v133
    %p136 = scmp.eq.s32.totalorder 0, 0
    // Predicated region
    $region26: #{tpu_custom_call.1} parent=1 // pred_check
      %p137 = pneg %p136
    $region27: #{tpu_custom_call.1} parent=1 // pred_check_branch
      %139 = sbr.rel (%p137) target = $region29
    $region28: #{tpu_custom_call.1} parent=1 // pred_region
      %140 = vst [vmem:[#allocation2] sm:$0xff] 0.0
    $region29: #{tpu_custom_call.1} parent=1 // pred_fallthru
      _
    %v141 = vld [vmem:[#allocation2] sm:$0xff]
    %v142 = vadd.f32 %v134, %v135
    %v143 = vadd.f32 %v141, %v142
    %144 = vst [vmem:[#allocation2] sm:$0xff] %v143
    // Predicated region
    $region30: #{tpu_custom_call.1} parent=1 // pred_check
      %p145 = pneg %p136
    $region31: #{tpu_custom_call.1} parent=1 // pred_check_branch
      %147 = sbr.rel (%p145) target = $region33
    $region32: #{tpu_custom_call.1} parent=1 // pred_region
      %v148 = vld [vmem:[#allocation2] sm:$0xff]
      %149 = vadd.xlane.f32.xlu0 %v148
      %v150 = vpop.xlane.xlu0 %149
      %v151 = vrot.slane %v150, 4
      %v152 = vadd.f32 %v150, %v151
      %v153 = vrot.slane %v152, 2
      %v154 = vadd.f32 %v152, %v153
      %v155 = vrot.slane %v154, 1
      %v156 = vadd.f32 %v154, %v155
      %s157 = vtos %v156
      %s158 = scalar_lea.smem [#allocation9], 0
      %159 = sst [smem:[%s158]] %s157
    $region33: #{tpu_custom_call.1} parent=1 // pred_fallthru
      _
    // Predicated region
    $region34: #{tpu_custom_call.1} parent=1 // pred_check
      _
    $region35: #{tpu_custom_call.1} parent=1 // pred_check_branch
      %161 = sbr.rel (0) target = $region37
    $region36: #{tpu_custom_call.1} parent=1 // pred_region
      %163 = vsyncadd [#allocation5], 0
      %s165 = sshll.u32 %s3, 4
      %s166 = int_to_ptr.hbm [resolvable:$true] %s165
      %168 = dma.smem_to_hbm [#allocation9], 16, %s166, [#allocation5]
    $region37: #{tpu_custom_call.1} parent=1 // pred_fallthru
      _
    // Predicated region
    $region38: #{tpu_custom_call.1} parent=1 // pred_check
      _
    $region39: #{tpu_custom_call.1} parent=1 // pred_check_branch
      %170 = sbr.rel (0) target = $region41
    $region40: #{tpu_custom_call.1} parent=1 // pred_region
      %172 = dma.done [#allocation5], 16
    $region41: #{tpu_custom_call.1} parent=1 // pred_fallthru
      _
    %173 = sfence
    %174 = vsyncpa [#allocation4], 1
    %175 = vsyncpa [#allocation7], 1
    %176 = vsyncpa [#allocation5], 1

</llo_original>
